<compile_context>
chip_gen: v6e
topology: v6e:2x2x1
jax: 0.10.0
libtpu: 0.0.40
codegen_flags: <defaults>
</compile_context>

<pallas_src>
import jax
import jax.numpy as jnp
from jax.experimental import pallas as pl
from jax.experimental.pallas import tpu as pltpu


def _round_up(x: int, m: int) -> int:
    return (x + m - 1) // m * m


def _choose_tiles(B, N, itemsize, *, target_block_bytes=2 << 20, max_tb=1024, max_tn=2048):
    # Lane-axis tile: full N when small enough (no (8,128) constraint when block == full
    # dim), otherwise a multiple of 128.
    tn = N if N <= max_tn else max_tn
    # Row tile sized so a single input block is ~target_block_bytes.
    tb = target_block_bytes // max(tn * itemsize, 1)
    tb = max(8, min(max_tb, (tb // 8) * 8))
    tb = min(tb, _round_up(B, 8))
    return tb, tn


def _contrastive_loss_kernel(exp_ref, tgt_ref, loss_ref, num_acc, den_acc):
    j = pl.program_id(1)  # class-dim (reduction) axis, last in the grid

    @pl.when(j == 0)
    def _():
        num_acc[...] = jnp.zeros_like(num_acc)
        den_acc[...] = jnp.zeros_like(den_acc)

    e = exp_ref[...].astype(jnp.float32)  # (tb, tn)
    t = tgt_ref[...].astype(jnp.float32)  # (tb, tn)

    num_acc[...] += jnp.sum(e * t, axis=-1, keepdims=True)  # (tb, 1)
    den_acc[...] += jnp.sum(e, axis=-1, keepdims=True)      # (tb, 1)

    @pl.when(j == pl.num_programs(1) - 1)
    def _():
        # -log(num/den) == log(den) - log(num); logs go to the EUP slot, no VPU divide.
        loss_ref[...] = jnp.log(den_acc[...]) - jnp.log(num_acc[...])


def contrastive_loss(exp_sim: jax.Array, targets: jax.Array, *,
                     target_block_bytes: int = 2 << 20) -> jax.Array:
    """Pallas implementation of ContrastiveLoss.forward. Returns a scalar."""
    assert exp_sim.shape == targets.shape
    assert exp_sim.ndim == 2
    B, N = exp_sim.shape
    itemsize = jnp.dtype(exp_sim.dtype).itemsize

    tb, tn = _choose_tiles(B, N, itemsize, target_block_bytes=target_block_bytes)
    B_pad = _round_up(B, tb)
    N_pad = _round_up(N, tn)

    # Column padding with zeros leaves num/den of real rows unchanged.
    if N_pad != N:
        exp_sim = jnp.pad(exp_sim, ((0, 0), (0, N_pad - N)))
        targets = jnp.pad(targets, ((0, 0), (0, N_pad - N)))
    # Row padding with ones gives finite (zero) losses for padded rows; they are sliced
    # off before the mean.
    if B_pad != B:
        exp_sim = jnp.pad(exp_sim, ((0, B_pad - B), (0, 0)), constant_values=1)
        targets = jnp.pad(targets, ((0, B_pad - B), (0, 0)), constant_values=1)

    grid = (B_pad // tb, N_pad // tn)

    per_row = pl.pallas_call(
        _contrastive_loss_kernel,
        out_shape=jax.ShapeDtypeStruct((B_pad, 1), jnp.float32),
        grid_spec=pltpu.PrefetchScalarGridSpec(
            num_scalar_prefetch=0,
            grid=grid,
            in_specs=[
                pl.BlockSpec((tb, tn), lambda i, j: (i, j)),
                pl.BlockSpec((tb, tn), lambda i, j: (i, j)),
            ],
            out_specs=pl.BlockSpec((tb, 1), lambda i, j: (i, 0)),
            scratch_shapes=[
                pltpu.VMEM((tb, 1), jnp.float32),  # partial num
                pltpu.VMEM((tb, 1), jnp.float32),  # partial den
            ],
        ),
        compiler_params=pltpu.CompilerParams(
            # batch axis parallel (megacore-shardable), class axis carries the reduction
            dimension_semantics=("parallel", "arbitrary"),
            vmem_limit_bytes=32 * 1024 * 1024,
        ),
        cost_estimate=pl.CostEstimate(
            flops=3 * B_pad * N_pad,
            transcendentals=2 * B_pad,
            bytes_accessed=2 * B_pad * N_pad * itemsize + 4 * B_pad,
        ),
    )(exp_sim, targets)

    # Final mean over the real rows in the wrapper (one jnp op).
    return jnp.mean(per_row[:B, 0])


def contrastive_loss_ref(exp_sim, targets):
    num = jnp.sum(exp_sim * targets, axis=-1)
    den = jnp.sum(exp_sim, axis=-1)
    return jnp.mean(-jnp.log(num / den))


if __name__ == "__main__":
    key = jax.random.PRNGKey(0)
    B, N = 16, 128  # small shapes; N on the lane axis

    k1, k2 = jax.random.split(key)
    # exp_sim is "exp of similarities" -> strictly positive.
    exp_sim = jnp.exp(jax.random.normal(k1, (B, N), dtype=jnp.float32) * 0.5)
    # targets: one-hot positives per row.
    pos_idx = jax.random.randint(k2, (B,), 0, N)
    targets = jax.nn.one_hot(pos_idx, N, dtype=jnp.float32)

    loss = jax.block_until_ready(contrastive_loss(exp_sim, targets))
    ref = jax.block_until_ready(contrastive_loss_ref(exp_sim, targets))

    assert jnp.allclose(loss, ref, rtol=1e-5, atol=1e-5), (loss, ref)
    print("KERNEL_OK")
</pallas_src>

<mosaic_0001>
module attributes {stable_mosaic.version = 11 : i64} {
  func.func @_contrastive_loss_kernel(%arg0: i32, %arg1: i32, %arg2: memref<16x128xf32, #tpu.memory_space<vmem>>, %arg3: memref<16x128xf32, #tpu.memory_space<vmem>>, %arg4: memref<16x1xf32, #tpu.memory_space<vmem>>, %arg5: memref<16x1xf32, #tpu.memory_space<vmem>>, %arg6: memref<16x1xf32, #tpu.memory_space<vmem>>) attributes {dimension_semantics = [#tpu.dimension_semantics<parallel>, #tpu.dimension_semantics<arbitrary>], iteration_bounds = array<i64: 1, 1>, scalar_prefetch = 0 : i64, scratch_operands = 2 : i64, tpu.core_type = #tpu.core_type<tc>, window_params = [{transform_indices = @transform_0, window_bounds = array<i64: 16, 128>}, {transform_indices = @transform_1, window_bounds = array<i64: 16, 128>}, {transform_indices = @transform_2, window_bounds = array<i64: 16, 1>}]} {
    %c0_i32 = arith.constant 0 : i32
    %0 = arith.cmpi eq, %arg1, %c0_i32 : i32
    %1 = arith.extui %0 : i1 to i32
    %c0_i32_0 = arith.constant 0 : i32
    %2 = arith.cmpi ne, %1, %c0_i32_0 : i32
    scf.if %2 {
      %cst_15 = arith.constant 0.000000e+00 : f32
      %19 = vector.broadcast %cst_15 : f32 to vector<16x1xf32>
      %c0_16 = arith.constant 0 : index
      %c0_17 = arith.constant 0 : index
      %20 = vector.load %arg5[%c0_16, %c0_17] : memref<16x1xf32, #tpu.memory_space<vmem>>, vector<16x1xf32>
      tpu.vector_store %arg5[%c0_16, %c0_17], %19 {strides = array<i32>} : memref<16x1xf32, #tpu.memory_space<vmem>>, vector<16x1xf32>,
      %cst_18 = arith.constant 0.000000e+00 : f32
      %21 = vector.broadcast %cst_18 : f32 to vector<16x1xf32>
      %c0_19 = arith.constant 0 : index
      %c0_20 = arith.constant 0 : index
      %22 = vector.load %arg6[%c0_19, %c0_20] : memref<16x1xf32, #tpu.memory_space<vmem>>, vector<16x1xf32>
      tpu.vector_store %arg6[%c0_19, %c0_20], %21 {strides = array<i32>} : memref<16x1xf32, #tpu.memory_space<vmem>>, vector<16x1xf32>,
    } else {
    }
    %c0 = arith.constant 0 : index
    %c0_1 = arith.constant 0 : index
    %3 = vector.load %arg2[%c0, %c0_1] : memref<16x128xf32, #tpu.memory_space<vmem>>, vector<16x128xf32>
    %c0_2 = arith.constant 0 : index
    %c0_3 = arith.constant 0 : index
    %4 = vector.load %arg3[%c0_2, %c0_3] : memref<16x128xf32, #tpu.memory_space<vmem>>, vector<16x128xf32>
    %c0_4 = arith.constant 0 : index
    %c0_5 = arith.constant 0 : index
    %5 = vector.load %arg5[%c0_4, %c0_5] : memref<16x1xf32, #tpu.memory_space<vmem>>, vector<16x1xf32>
    %6 = arith.mulf %3, %4 : vector<16x128xf32>
    %cst = arith.constant dense<0.000000e+00> : vector<16xf32>
    %7 = vector.multi_reduction <add>, %6, %cst [1] : vector<16x128xf32> to vector<16xf32>
    %8 = vector.shape_cast %7 : vector<16xf32> to vector<16x1xf32>
    %9 = arith.addf %5, %8 : vector<16x1xf32>
    %c0_6 = arith.constant 0 : index
    %c0_7 = arith.constant 0 : index
    %10 = vector.load %arg5[%c0_6, %c0_7] : memref<16x1xf32, #tpu.memory_space<vmem>>, vector<16x1xf32>
    tpu.vector_store %arg5[%c0_6, %c0_7], %9 {strides = array<i32>} : memref<16x1xf32, #tpu.memory_space<vmem>>, vector<16x1xf32>,
    %c0_8 = arith.constant 0 : index
    %c0_9 = arith.constant 0 : index
    %11 = vector.load %arg6[%c0_8, %c0_9] : memref<16x1xf32, #tpu.memory_space<vmem>>, vector<16x1xf32>
    %cst_10 = arith.constant dense<0.000000e+00> : vector<16xf32>
    %12 = vector.multi_reduction <add>, %3, %cst_10 [1] : vector<16x128xf32> to vector<16xf32>
    %13 = vector.shape_cast %12 : vector<16xf32> to vector<16x1xf32>
    %14 = arith.addf %11, %13 : vector<16x1xf32>
    %c0_11 = arith.constant 0 : index
    %c0_12 = arith.constant 0 : index
    %15 = vector.load %arg6[%c0_11, %c0_12] : memref<16x1xf32, #tpu.memory_space<vmem>>, vector<16x1xf32>
    tpu.vector_store %arg6[%c0_11, %c0_12], %14 {strides = array<i32>} : memref<16x1xf32, #tpu.memory_space<vmem>>, vector<16x1xf32>,
    %c0_i32_13 = arith.constant 0 : i32
    %16 = arith.cmpi eq, %arg1, %c0_i32_13 : i32
    %17 = arith.extui %16 : i1 to i32
    %c0_i32_14 = arith.constant 0 : i32
    %18 = arith.cmpi ne, %17, %c0_i32_14 : i32
    scf.if %18 {
      %c0_15 = arith.constant 0 : index
      %c0_16 = arith.constant 0 : index
      %19 = vector.load %arg6[%c0_15, %c0_16] : memref<16x1xf32, #tpu.memory_space<vmem>>, vector<16x1xf32>
      %20 = math.log %19 : vector<16x1xf32>
      %c0_17 = arith.constant 0 : index
      %c0_18 = arith.constant 0 : index
      %21 = vector.load %arg5[%c0_17, %c0_18] : memref<16x1xf32, #tpu.memory_space<vmem>>, vector<16x1xf32>
      %22 = math.log %21 : vector<16x1xf32>
      %23 = arith.subf %20, %22 : vector<16x1xf32>
      %c0_19 = arith.constant 0 : index
      %c0_20 = arith.constant 0 : index
      %24 = vector.load %arg4[%c0_19, %c0_20] : memref<16x1xf32, #tpu.memory_space<vmem>>, vector<16x1xf32>
      tpu.vector_store %arg4[%c0_19, %c0_20], %23 {strides = array<i32>} : memref<16x1xf32, #tpu.memory_space<vmem>>, vector<16x1xf32>,
    } else {
    }
    return
  }
  func.func @transform_0(%arg0: i32, %arg1: i32) -> (i32, i32) {
    %c0_i32 = arith.constant 0 : i32
    return %arg0, %arg1 : i32, i32
  }
  func.func @transform_1(%arg0: i32, %arg1: i32) -> (i32, i32) {
    %c0_i32 = arith.constant 0 : i32
    return %arg0, %arg1 : i32, i32
  }
  func.func @transform_2(%arg0: i32, %arg1: i32) -> (i32, i32) {
    %c0_i32 = arith.constant 0 : i32
    %c0_i32_0 = arith.constant 0 : i32
    return %arg0, %c0_i32 : i32, i32
  }
}

</mosaic_0001>

<llo_original>
// kernel: tpu_custom_call.1
$region0: #{tpu_custom_call.1}
  #allocation0 [shape = 'u32[]', space=smem, size = 0x4, offset = 0x4, fixed_abs, tag = 'smem constant byte address 0x4 - core index']
  #allocation1 [shape = 'u32[144,128]{1,0:T(1,128)}', space=vmem, size = 0x12000, scoped, tag = 'internal scratch']
  #allocation2 [shape = 'f32[16,1]{1,0:T(8,128)}', space=vmem, size = 0x2000, scoped, tag = 'scratch operand']
  #allocation3 [shape = 'f32[16,1]{1,0:T(8,128)}', space=vmem, size = 0x2000, scoped, tag = 'scratch operand']
  %s0 = inlined_call_operand.hbm [shape: f32[16,128], index: 0, kind: input, shape index: {}]
  %s1 = inlined_call_operand.hbm [shape: f32[16,128], index: 1, kind: input, shape index: {}]
  %s2 = inlined_call_operand.vmem [shape: f32[16,1], index: 2, kind: output, shape index: {}]
  %s3 = sld [smem:[#allocation0]]
  $region34: #{tpu_custom_call.1} parent=0
    _
  %s5 = ssub.s32 1, %s3
  %s6 = scalar_select 0, %s5, %s3
  $region1: #{tpu_custom_call.1} parent=0
    #allocation4 [shape = 'u8[8192]{0}', space=vmem, size = 0x2000, scoped, tag = 'input window, operand 0, single buffered']
    #allocation5 [shape = 's32[1]{0}', space=sflag, size = 0x4, scoped, tag = 'scoped memory for tpu_custom_call.1']
    #allocation6 [shape = 'u8[8192]{0}', space=vmem, size = 0x2000, scoped, tag = 'input window, operand 1, single buffered']
    #allocation7 [shape = 's32[1]{0}', space=sflag, size = 0x4, scoped, tag = 'scoped memory for tpu_custom_call.1']
    %7 = vsyncpa [#allocation5], 0
    %8 = vsyncpa [#allocation7], 0
    // Predicated region
    $region2: #{tpu_custom_call.1} parent=1 // pred_check
      _
    $region3: #{tpu_custom_call.1} parent=1 // pred_check_branch
      %10 = sbr.rel (0) target = $region5
    $region4: #{tpu_custom_call.1} parent=1 // pred_region
      %s12 = ssub.s32 256, 256
      %13 = vsyncadd [#allocation5], %s12
      %s14 = sshll.u32 [#allocation4], 4
      %s15 = int_to_ptr.vmem [resolvable:$true] %s14
      %20 = dma.hbm_to_vmem [thread:$0]  %s0, 256, %s15, [#allocation5], 128, 128, 8
    $region5: #{tpu_custom_call.1} parent=1 // pred_fallthru
      _
    // Predicated region
    $region6: #{tpu_custom_call.1} parent=1 // pred_check
      _
    $region7: #{tpu_custom_call.1} parent=1 // pred_check_branch
      %22 = sbr.rel (0) target = $region9
    $region8: #{tpu_custom_call.1} parent=1 // pred_region
      %s24 = ssub.s32 256, 256
      %25 = vsyncadd [#allocation7], %s24
      %s26 = sshll.u32 [#allocation6], 4
      %s27 = int_to_ptr.vmem [resolvable:$true] %s26
      %32 = dma.hbm_to_vmem [thread:$0]  %s1, 256, %s27, [#allocation7], 128, 128, 8
    $region9: #{tpu_custom_call.1} parent=1 // pred_fallthru
      _
    // Predicated region
    $region10: #{tpu_custom_call.1} parent=1 // pred_check
      _
    $region11: #{tpu_custom_call.1} parent=1 // pred_check_branch
      %34 = sbr.rel (0) target = $region13
    $region12: #{tpu_custom_call.1} parent=1 // pred_region
      %35 = dma.done [#allocation5], 256
    $region13: #{tpu_custom_call.1} parent=1 // pred_fallthru
      _
    // Predicated region
    $region14: #{tpu_custom_call.1} parent=1 // pred_check
      _
    $region15: #{tpu_custom_call.1} parent=1 // pred_check_branch
      %37 = sbr.rel (0) target = $region17
    $region16: #{tpu_custom_call.1} parent=1 // pred_region
      %38 = dma.done [#allocation7], 256
    $region17: #{tpu_custom_call.1} parent=1 // pred_fallthru
      _
    %p39 = scmp.eq.s32.totalorder 0, 0
    // Predicated region
    $region18: #{tpu_custom_call.1} parent=1 // pred_check
      %p40 = pneg %p39
    $region19: #{tpu_custom_call.1} parent=1 // pred_check_branch
      %42 = sbr.rel (%p40) target = $region21
    $region20: #{tpu_custom_call.1} parent=1 // pred_region
      %vm43 = vcmask 7168
      %44 = vst.msk [vmem:[#allocation2] sm:$0xff] %vm43, 0.0
      %45 = vst.msk [vmem:[#allocation2 + $0x8] sm:$0xff] %vm43, 0.0
      %46 = vst.msk [vmem:[#allocation3] sm:$0xff] %vm43, 0.0
      %47 = vst.msk [vmem:[#allocation3 + $0x8] sm:$0xff] %vm43, 0.0
    $region21: #{tpu_custom_call.1} parent=1 // pred_fallthru
      _
    %v48 = vld [vmem:[#allocation4] sm:$0xff]
    %v49 = vld [vmem:[#allocation4 + $0x8] sm:$0xff]
    %v50 = vld [vmem:[#allocation6] sm:$0xff]
    %v51 = vld [vmem:[#allocation6 + $0x8] sm:$0xff]
    %v52 = vld [vmem:[#allocation2] sm:$0xff]
    %v53 = vld [vmem:[#allocation2 + $0x8] sm:$0xff]
    %v54 = vmul.f32 %v48, %v50
    %v55 = vmul.f32 %v49, %v51
    %56 = vadd.xlane.f32.xlu0 %v54
    %v57 = vpop.xlane.xlu0 %56
    %58 = vadd.xlane.f32.xlu0 %v55
    %v59 = vpop.xlane.xlu0 %58
    %v60 = vadd.f32 %v52, %v57
    %v61 = vadd.f32 %v53, %v59
    %vm62 = vcmask 7168
    %63 = vst.msk [vmem:[#allocation2] sm:$0xff] %vm62, %v60
    %64 = vst.msk [vmem:[#allocation2 + $0x8] sm:$0xff] %vm62, %v61
    %v65 = vld [vmem:[#allocation3] sm:$0xff]
    %v66 = vld [vmem:[#allocation3 + $0x8] sm:$0xff]
    %67 = vadd.xlane.f32.xlu0 %v48
    %v68 = vpop.xlane.xlu0 %67
    %69 = vadd.xlane.f32.xlu0 %v49
    %v70 = vpop.xlane.xlu0 %69
    %v71 = vadd.f32 %v65, %v68
    %v72 = vadd.f32 %v66, %v70
    %73 = vst.msk [vmem:[#allocation3] sm:$0xff] %vm62, %v71
    %74 = vst.msk [vmem:[#allocation3 + $0x8] sm:$0xff] %vm62, %v72
    // Predicated region
    $region22: #{tpu_custom_call.1} parent=1 // pred_check
      %p75 = pneg %p39
    $region23: #{tpu_custom_call.1} parent=1 // pred_check_branch
      %77 = sbr.rel (%p75) target = $region25
    $region24: #{tpu_custom_call.1} parent=1 // pred_region
      %v78 = vld [vmem:[#allocation3] sm:$0xff]
      %v79 = vld [vmem:[#allocation3 + $0x8] sm:$0xff]
      %v80 = vlog2.pop %v78
      %v81 = vmul.f32 %v80, 0.6931472
      %v82 = vlog2.pop %v79
      %v83 = vmul.f32 %v82, 0.6931472
      %v84 = vld [vmem:[#allocation2] sm:$0xff]
      %v85 = vld [vmem:[#allocation2 + $0x8] sm:$0xff]
      %v86 = vlog2.pop %v84
      %v87 = vmul.f32 %v86, 0.6931472
      %v88 = vlog2.pop %v85
      %v89 = vmul.f32 %v88, 0.6931472
      %v90 = vsub.f32 %v81, %v87
      %v91 = vsub.f32 %v83, %v89
      %92 = vst.msk [vmem:[%s2] sm:$0xff] %vm62, %v90
      %93 = vst.msk [vmem:[%s2 + $0x8] sm:$0xff] %vm62, %v91
    $region25: #{tpu_custom_call.1} parent=1 // pred_fallthru
      _
    // Predicated region
    $region26: #{tpu_custom_call.1} parent=1 // pred_check
      _
    $region27: #{tpu_custom_call.1} parent=1 // pred_check_branch
      %95 = sbr.rel (0) target = $region29
    $region28: #{tpu_custom_call.1} parent=1 // pred_region
      _
    $region29: #{tpu_custom_call.1} parent=1 // pred_fallthru
      _
    // Predicated region
    $region30: #{tpu_custom_call.1} parent=1 // pred_check
      _
    $region31: #{tpu_custom_call.1} parent=1 // pred_check_branch
      %97 = sbr.rel (0) target = $region33
    $region32: #{tpu_custom_call.1} parent=1 // pred_region
      _
    $region33: #{tpu_custom_call.1} parent=1 // pred_fallthru
      _
    %98 = vsyncpa [#allocation5], 1
    %99 = vsyncpa [#allocation7], 1

</llo_original>
